<compile_context>
chip_gen: v5e
topology: v5e:2x2
jax: 0.10.0
libtpu: 0.0.40
codegen_flags: <defaults>
</compile_context>

<pallas_src>
import functools

import jax
import jax.numpy as jnp
from jax.experimental import pallas as pl
from jax.experimental.pallas import tpu as pltpu


def _focal_weight(base, gamma):
    # (1 - p_t) ** gamma, gamma is a trace-time Python float.
    if float(gamma) == int(gamma) and gamma >= 0:
        w = jnp.ones_like(base)
        for _ in range(int(gamma)):
            w = w * base
        return w
    return jnp.exp(gamma * jnp.log(jnp.maximum(base, 1e-30)))


def _loss_kernel(packed_ref, out_ref, *, gamma, velo_loss_weight,
                 normalize_by_positive, bce, approx_recip, K, E, N2, M, T):
    # Packed layout (rows of a lane-dense [R, T] buffer):
    #   row 0        : target            (valid lanes [:E],  pads = 0)
    #   row 1        : pred_velo flat    (valid lanes [:N2], pads = 0)
    #   row 2        : target_velo flat  (valid lanes [:N2], pads = 0)
    #   row 3        : velo_mask x cols  (valid lanes [:N2], pads = 0)
    #   row 4        : det_gt            (valid lanes [:M],  pads = 0)
    #   row 5        : det_score         (valid lanes [:M],  pads = 0)
    #   rows 6..6+K-1: prediction logits (valid lanes [:E],  pads = 0)

    # ---- classification losses over K prediction heads ----
    t = packed_ref[0:1, :].astype(jnp.float32)          # [1, T]
    x = packed_ref[6:6 + K, :].astype(jnp.float32)      # [K, T] logits

    if normalize_by_positive:
        # Padded lanes are zero, so they never count as nonzero.
        # NOTE: faithful to PyTorch -- an all-zero target yields inf/nan here.
        normalizer = jnp.sum((t != 0.0).astype(jnp.float32))
    else:
        normalizer = jnp.float32(E)

    t_b = jnp.broadcast_to(t, (K, T))                    # hoisted broadcast

    # Numerically stable BCE-with-logits; exp(-|x|) is shared with the sigmoid.
    e = jnp.exp(-jnp.abs(x))                                       # EUP: exp
    ce = jnp.maximum(x, 0.0) - x * t_b + jnp.log1p(e)              # EUP: log
    if bce:
        cls = ce
    else:
        if approx_recip:
            r = pl.reciprocal(1.0 + e, approx=True)                # EUP: vrcp
        else:
            r = 1.0 / (1.0 + e)                                    # EUP: recip
        p = jnp.where(x >= 0.0, r, e * r)                          # == sigmoid(x)
        p_t = p * t_b + (1.0 - p) * (1.0 - t_b)
        cls = ce * _focal_weight(jnp.maximum(1.0 - p_t, 0.0), gamma)
    if E != T:
        lane = jax.lax.broadcasted_iota(jnp.int32, (K, T), 1)
        cls = jnp.where(lane < E, cls, 0.0)
    # sum_k( sum(loss_k) / normalizer ) / K  ==  sum(all) / normalizer / K
    losses = jnp.sum(cls) / normalizer / jnp.float32(K)

    # ---- velocity smooth-L1 (beta = 1.0); padded lanes are exactly zero ----
    pv = packed_ref[1:2, :].astype(jnp.float32)
    tv = packed_ref[2:3, :].astype(jnp.float32)
    vm = packed_ref[3:4, :].astype(jnp.float32)
    d = pv - tv
    ad = jnp.abs(d)
    sl1 = jnp.where(ad < 1.0, 0.5 * d * d, ad - 0.5) * vm
    losses = losses + velo_loss_weight * (jnp.sum(sl1) / jnp.float32(N2))

    # ---- detection score MSE loss; padded lanes are exactly zero ----
    dg = packed_ref[4:5, :].astype(jnp.float32)
    ds = packed_ref[5:6, :].astype(jnp.float32)
    diff = ds - dg
    losses = losses + 0.5 * (jnp.sum(diff * diff) / jnp.float32(M))

    out_ref[0] = losses


def loss_forward(preds, target, pred_velo, target_velo, velo_mask, det_gt, det_score,
                 *, gamma=2.0, velo_loss_weight=0.1, normalize_by_positive=False,
                 use_approx_reciprocal=False):
    """preds: [K, E, 1] (or [K, E]) stacked prediction heads. Returns scalar f32 loss."""
    preds = jnp.asarray(preds)
    target = jnp.asarray(target)
    pred_velo = jnp.asarray(pred_velo)
    target_velo = jnp.asarray(target_velo)
    velo_mask = jnp.asarray(velo_mask)
    det_gt = jnp.asarray(det_gt)
    det_score = jnp.asarray(det_score)

    K = preds.shape[0]
    preds2d = preds.reshape(K, -1)            # lane-dense [K, E]; free metadata reshape
    E = preds2d.shape[1]
    N = pred_velo.shape[0]
    C = pred_velo.shape[1] if pred_velo.ndim > 1 else 1
    N2 = N * C
    M = det_score.reshape(-1).shape[0]

    # Native storage dtype for the packed buffer (no gratuitous f32 upcast).
    pack_dtype = jnp.result_type(preds.dtype, target.dtype, pred_velo.dtype,
                                 target_velo.dtype, velo_mask.dtype,
                                 det_gt.dtype, det_score.dtype)

    T = max(E, N2, M)
    T = ((T + 127) // 128) * 128              # 128-lane aligned
    R = ((6 + K + 7) // 8) * 8                # 8-sublane aligned

    def _row(v):
        v = jnp.ravel(v).astype(pack_dtype)
        return jnp.pad(v, (0, T - v.shape[0]))

    # velo_mask [N] broadcast over the C velocity columns, then flattened row-major.
    vm2 = jnp.ravel(jnp.broadcast_to(jnp.ravel(velo_mask)[:, None], (N, C)))
    rows = [
        _row(target),        # row 0: target            [:E]
        _row(pred_velo),     # row 1: pred_velo flat    [:N2]
        _row(target_velo),   # row 2: target_velo flat  [:N2]
        _row(vm2),           # row 3: velo_mask x C     [:N2]
        _row(det_gt),        # row 4: det_gt            [:M]
        _row(det_score),     # row 5: det_score         [:M]
    ] + [_row(preds2d[k]) for k in range(K)]   # rows 6..6+K-1: logits [:E]
    packed = jnp.stack(rows)
    packed = jnp.pad(packed, ((0, R - packed.shape[0]), (0, 0)))

    bce = gamma is None
    kernel = functools.partial(
        _loss_kernel,
        gamma=0.0 if bce else float(gamma),
        velo_loss_weight=float(velo_loss_weight),
        normalize_by_positive=bool(normalize_by_positive),
        bce=bce, approx_recip=bool(use_approx_reciprocal),
        K=K, E=E, N2=N2, M=M, T=T,
    )
    out = pl.pallas_call(
        kernel,
        out_shape=jax.ShapeDtypeStruct((1,), jnp.float32),
        in_specs=[pl.BlockSpec(memory_space=pltpu.MemorySpace.VMEM)],
        out_specs=pl.BlockSpec(memory_space=pltpu.MemorySpace.SMEM),
    )(packed)
    return out[0]


def _loss_reference(preds, target, pred_velo, target_velo, velo_mask, det_gt, det_score,
                    gamma, velo_loss_weight, normalize_by_positive):
    """Pure-JAX mirror of the PyTorch forward semantics."""
    preds = preds.astype(jnp.float32)
    target = target.astype(jnp.float32)
    K = preds.shape[0]
    normalizer = (jnp.sum(target != 0).astype(jnp.float32)
                  if normalize_by_positive else jnp.float32(target.shape[0]))
    losses = 0.0
    for k in range(K):
        x = preds[k]
        ce = jnp.maximum(x, 0.0) - x * target + jnp.log(1.0 + jnp.exp(-jnp.abs(x)))
        if gamma is None:
            loss = ce
        else:
            p = jax.nn.sigmoid(x)
            p_t = p * target + (1.0 - p) * (1.0 - target)
            loss = ce * _focal_weight(jnp.maximum(1.0 - p_t, 0.0), gamma)
        losses = losses + jnp.sum(loss) / normalizer
    losses = losses / K
    d = pred_velo.astype(jnp.float32) - target_velo.astype(jnp.float32)
    ad = jnp.abs(d)
    sl1 = jnp.where(ad < 1.0, 0.5 * d * d, ad - 0.5)
    sl1 = sl1 * velo_mask.astype(jnp.float32)[:, None]
    velo_loss = jnp.sum(sl1) / (sl1.shape[0] * sl1.shape[1])
    losses = losses + velo_loss_weight * velo_loss
    mse = (det_score.reshape(-1).astype(jnp.float32) - det_gt.astype(jnp.float32)) ** 2
    losses = losses + 0.5 * jnp.sum(mse) / mse.shape[0]
    return losses


if __name__ == "__main__":
    K, E, N, M = 2, 64, 16, 16
    velo_loss_weight = 0.1

    key = jax.random.PRNGKey(0)
    k1, k2, k3, k4, k5, k6, k7 = jax.random.split(key, 7)
    preds = jax.random.normal(k1, (K, E, 1), jnp.float32)                 # logits
    target = (jax.random.uniform(k2, (E, 1)) > 0.5).astype(jnp.float32)   # {0,1}
    pred_velo = jax.random.normal(k3, (N, 2), jnp.float32)
    target_velo = jax.random.normal(k4, (N, 2), jnp.float32)
    velo_mask = (jax.random.uniform(k5, (N,)) > 0.3).astype(jnp.float32)
    det_gt = (jax.random.uniform(k6, (M,)) > 0.5).astype(jnp.float32)
    det_score = jax.random.uniform(k7, (M, 1), jnp.float32)

    ok = True
    for gamma in (2.0, None):                         # focal path and plain-BCE path
        for normalize_by_positive in (False, True):
            out = loss_forward(preds, target, pred_velo, target_velo, velo_mask,
                               det_gt, det_score, gamma=gamma,
                               velo_loss_weight=velo_loss_weight,
                               normalize_by_positive=normalize_by_positive)
            out = jax.block_until_ready(out)
            ref = _loss_reference(preds, target, pred_velo, target_velo, velo_mask,
                                  det_gt, det_score, gamma, velo_loss_weight,
                                  normalize_by_positive)
            ref = jax.block_until_ready(ref)
            ok = ok and bool(jnp.allclose(out, ref, rtol=1e-5, atol=1e-5))
            assert ok, (gamma, normalize_by_positive, out, ref)

    print("KERNEL_OK")
</pallas_src>

<mosaic_0001>
module attributes {stable_mosaic.version = 11 : i64} {
  func.func @_loss_kernel(%arg0: memref<8x128xf32, #tpu.memory_space<vmem>>, %arg1: memref<1xf32, #tpu.memory_space<smem>>) attributes {dimension_semantics = [], scalar_prefetch = 0 : i64, scratch_operands = 0 : i64, tpu.core_type = #tpu.core_type<tc>} {
    %c0 = arith.constant 0 : index
    %c0_0 = arith.constant 0 : index
    %0 = vector.load %arg0[%c0, %c0_0] : memref<8x128xf32, #tpu.memory_space<vmem>>, vector<1x128xf32>
    %c6 = arith.constant 6 : index
    %c0_1 = arith.constant 0 : index
    %1 = vector.load %arg0[%c6, %c0_1] : memref<8x128xf32, #tpu.memory_space<vmem>>, vector<2x128xf32>
    %2 = vector.shape_cast %0 : vector<1x128xf32> to vector<1x128xf32>
    %3 = vector.broadcast %2 : vector<1x128xf32> to vector<2x128xf32>
    %4 = math.absf %1 : vector<2x128xf32>
    %cst = arith.constant 0.000000e+00 : f32
    %5 = vector.broadcast %cst : f32 to vector<2x128xf32>
    %6 = arith.subf %5, %4 : vector<2x128xf32>
    %7 = math.exp %6 : vector<2x128xf32>
    %cst_2 = arith.constant 0.000000e+00 : f32
    %8 = vector.broadcast %cst_2 : f32 to vector<2x128xf32>
    %9 = arith.maximumf %1, %8 : vector<2x128xf32>
    %10 = arith.mulf %1, %3 : vector<2x128xf32>
    %11 = arith.subf %9, %10 : vector<2x128xf32>
    %12 = math.log1p %7 : vector<2x128xf32>
    %13 = arith.addf %11, %12 : vector<2x128xf32>
    %cst_3 = arith.constant 1.000000e+00 : f32
    %14 = vector.broadcast %cst_3 : f32 to vector<2x128xf32>
    %15 = arith.addf %14, %7 : vector<2x128xf32>
    %cst_4 = arith.constant 1.000000e+00 : f32
    %16 = vector.broadcast %cst_4 : f32 to vector<2x128xf32>
    %17 = arith.divf %16, %15 : vector<2x128xf32>
    %cst_5 = arith.constant 0.000000e+00 : f32
    %18 = vector.broadcast %cst_5 : f32 to vector<2x128xf32>
    %19 = arith.cmpf oge, %1, %18 : vector<2x128xf32>
    %20 = arith.mulf %7, %17 : vector<2x128xf32>
    %21 = arith.select %19, %17, %20 : vector<2x128xi1>, vector<2x128xf32>
    %22 = arith.mulf %21, %3 : vector<2x128xf32>
    %cst_6 = arith.constant 1.000000e+00 : f32
    %23 = vector.broadcast %cst_6 : f32 to vector<2x128xf32>
    %24 = arith.subf %23, %21 : vector<2x128xf32>
    %cst_7 = arith.constant 1.000000e+00 : f32
    %25 = vector.broadcast %cst_7 : f32 to vector<2x128xf32>
    %26 = arith.subf %25, %3 : vector<2x128xf32>
    %27 = arith.mulf %24, %26 : vector<2x128xf32>
    %28 = arith.addf %22, %27 : vector<2x128xf32>
    %cst_8 = arith.constant 1.000000e+00 : f32
    %29 = vector.broadcast %cst_8 : f32 to vector<2x128xf32>
    %30 = arith.subf %29, %28 : vector<2x128xf32>
    %cst_9 = arith.constant 0.000000e+00 : f32
    %31 = vector.broadcast %cst_9 : f32 to vector<2x128xf32>
    %32 = arith.maximumf %30, %31 : vector<2x128xf32>
    %cst_10 = arith.constant 1.000000e+00 : f32
    %33 = vector.broadcast %cst_10 : f32 to vector<2x128xf32>
    %34 = arith.mulf %33, %32 : vector<2x128xf32>
    %35 = arith.mulf %34, %32 : vector<2x128xf32>
    %36 = arith.mulf %13, %35 : vector<2x128xf32>
    %37 = tpu.iota {dimensions = array<i32: 1>} : vector<2x128xi32>
    %c64_i32 = arith.constant 64 : i32
    %38 = vector.broadcast %c64_i32 : i32 to vector<2x128xi32>
    %39 = arith.cmpi slt, %37, %38 : vector<2x128xi32>
    %cst_11 = arith.constant 0.000000e+00 : f32
    %40 = vector.broadcast %cst_11 : f32 to vector<2x128xf32>
    %41 = arith.select %39, %36, %40 : vector<2x128xi1>, vector<2x128xf32>
    %42 = vector.shape_cast %41 : vector<2x128xf32> to vector<1x2x128xf32>
    %cst_12 = arith.constant dense<0.000000e+00> : vector<1xf32>
    %43 = vector.multi_reduction <add>, %42, %cst_12 [1, 2] : vector<1x2x128xf32> to vector<1xf32>
    %44 = vector.shape_cast %43 : vector<1xf32> to vector<1x1x1xf32>
    %45 = vector.extract %44[0, 0, 0] : f32 from vector<1x1x1xf32>
    %cst_13 = arith.constant 6.400000e+01 : f32
    %46 = arith.divf %45, %cst_13 : f32
    %cst_14 = arith.constant 2.000000e+00 : f32
    %47 = arith.divf %46, %cst_14 : f32
    %c1 = arith.constant 1 : index
    %c0_15 = arith.constant 0 : index
    %48 = vector.load %arg0[%c1, %c0_15] : memref<8x128xf32, #tpu.memory_space<vmem>>, vector<1x128xf32>
    %c2 = arith.constant 2 : index
    %c0_16 = arith.constant 0 : index
    %49 = vector.load %arg0[%c2, %c0_16] : memref<8x128xf32, #tpu.memory_space<vmem>>, vector<1x128xf32>
    %c3 = arith.constant 3 : index
    %c0_17 = arith.constant 0 : index
    %50 = vector.load %arg0[%c3, %c0_17] : memref<8x128xf32, #tpu.memory_space<vmem>>, vector<1x128xf32>
    %51 = arith.subf %48, %49 : vector<1x128xf32>
    %52 = math.absf %51 : vector<1x128xf32>
    %cst_18 = arith.constant 1.000000e+00 : f32
    %53 = vector.broadcast %cst_18 : f32 to vector<1x128xf32>
    %54 = arith.cmpf olt, %52, %53 : vector<1x128xf32>
    %cst_19 = arith.constant 5.000000e-01 : f32
    %55 = vector.broadcast %cst_19 : f32 to vector<1x128xf32>
    %56 = arith.mulf %55, %51 : vector<1x128xf32>
    %57 = arith.mulf %56, %51 : vector<1x128xf32>
    %cst_20 = arith.constant 5.000000e-01 : f32
    %58 = vector.broadcast %cst_20 : f32 to vector<1x128xf32>
    %59 = arith.subf %52, %58 : vector<1x128xf32>
    %60 = arith.select %54, %57, %59 : vector<1x128xi1>, vector<1x128xf32>
    %61 = arith.mulf %60, %50 : vector<1x128xf32>
    %62 = vector.shape_cast %61 : vector<1x128xf32> to vector<1x1x128xf32>
    %cst_21 = arith.constant dense<0.000000e+00> : vector<1xf32>
    %63 = vector.multi_reduction <add>, %62, %cst_21 [1, 2] : vector<1x1x128xf32> to vector<1xf32>
    %64 = vector.shape_cast %63 : vector<1xf32> to vector<1x1x1xf32>
    %65 = vector.extract %64[0, 0, 0] : f32 from vector<1x1x1xf32>
    %cst_22 = arith.constant 3.200000e+01 : f32
    %66 = arith.divf %65, %cst_22 : f32
    %cst_23 = arith.constant 1.000000e-01 : f32
    %67 = arith.mulf %cst_23, %66 : f32
    %68 = arith.addf %47, %67 : f32
    %c4 = arith.constant 4 : index
    %c0_24 = arith.constant 0 : index
    %69 = vector.load %arg0[%c4, %c0_24] : memref<8x128xf32, #tpu.memory_space<vmem>>, vector<1x128xf32>
    %c5 = arith.constant 5 : index
    %c0_25 = arith.constant 0 : index
    %70 = vector.load %arg0[%c5, %c0_25] : memref<8x128xf32, #tpu.memory_space<vmem>>, vector<1x128xf32>
    %71 = arith.subf %70, %69 : vector<1x128xf32>
    %72 = arith.mulf %71, %71 : vector<1x128xf32>
    %73 = vector.shape_cast %72 : vector<1x128xf32> to vector<1x1x128xf32>
    %cst_26 = arith.constant dense<0.000000e+00> : vector<1xf32>
    %74 = vector.multi_reduction <add>, %73, %cst_26 [1, 2] : vector<1x1x128xf32> to vector<1xf32>
    %75 = vector.shape_cast %74 : vector<1xf32> to vector<1x1x1xf32>
    %76 = vector.extract %75[0, 0, 0] : f32 from vector<1x1x1xf32>
    %cst_27 = arith.constant 1.600000e+01 : f32
    %77 = arith.divf %76, %cst_27 : f32
    %cst_28 = arith.constant 5.000000e-01 : f32
    %78 = arith.mulf %cst_28, %77 : f32
    %79 = arith.addf %68, %78 : f32
    %c0_29 = arith.constant 0 : index
    %80 = memref.load %arg1[%c0_29] : memref<1xf32, #tpu.memory_space<smem>>
    memref.store %79, %arg1[%c0_29] : memref<1xf32, #tpu.memory_space<smem>>
    return
  }
}

</mosaic_0001>

<llo_original>
// kernel: tpu_custom_call.1
$region0: #{tpu_custom_call.1}
  #allocation0 [shape = 'u32[]', space=smem, size = 0x4, offset = 0x4, fixed_abs, tag = 'smem constant byte address 0x4 - core index']
  #allocation1 [shape = 'u32[72,128]{1,0:T(1,128)}', space=vmem, size = 0x9000, scoped, tag = 'internal scratch']
  %s0 = inlined_call_operand.hbm [shape: f32[8,128], index: 0, kind: input, shape index: {}]
  %s1 = inlined_call_operand.hbm [shape: f32[1], index: 1, kind: output, shape index: {}]
  %s2 = sld [smem:[#allocation0]]
  $region18: #{tpu_custom_call.1} parent=0
    _
  %s4 = ssub.s32 1, %s2
  %s5 = scalar_select 0, %s4, %s2
  $region1: #{tpu_custom_call.1} parent=0
    #allocation2 [shape = 'u8[4096]{0}', space=vmem, size = 0x1000, scoped, tag = 'input window, operand 0, single buffered']
    #allocation3 [shape = 's32[1]{0}', space=sflag, size = 0x4, scoped, tag = 'scoped memory for tpu_custom_call.1']
    #allocation4 [shape = 's32[1]{0}', space=sflag, size = 0x4, scoped, tag = 'scoped memory for tpu_custom_call.1']
    #allocation5 [shape = 'u8[512]{0}', space=smem, size = 0x200, scoped, tag = 'output window, operand 0, single buffered']
    %6 = vsyncpa [#allocation3], 0
    %7 = vsyncpa [#allocation4], 0
    // Predicated region
    $region2: #{tpu_custom_call.1} parent=1 // pred_check
      _
    $region3: #{tpu_custom_call.1} parent=1 // pred_check_branch
      %9 = sbr.rel (0) target = $region5
    $region4: #{tpu_custom_call.1} parent=1 // pred_region
      %11 = vsyncadd [#allocation3], 0
      %s13 = sshll.u32 %s0, 4
      %s14 = int_to_ptr.hbm [resolvable:$true] %s13
      %s15 = sshll.u32 [#allocation2], 4
      %s16 = int_to_ptr.vmem [resolvable:$true] %s15
      %18 = dma.hbm_to_vmem [thread:$0]  %s14, 128, %s16, [#allocation3]
    $region5: #{tpu_custom_call.1} parent=1 // pred_fallthru
      _
    // Predicated region
    $region6: #{tpu_custom_call.1} parent=1 // pred_check
      _
    $region7: #{tpu_custom_call.1} parent=1 // pred_check_branch
      %20 = sbr.rel (0) target = $region9
    $region8: #{tpu_custom_call.1} parent=1 // pred_region
      %22 = dma.done [#allocation3], 128
    $region9: #{tpu_custom_call.1} parent=1 // pred_fallthru
      _
    %v23 = vld [vmem:[#allocation2] sm:$0x1]
    %v24 = vld [vmem:[#allocation2 + $0x6] sm:$0x3]
    %v25 = vperm.slane %v23, 0
    %v26 = vand.u32 2147483647, %v24
    %v27 = vsub.f32 0.0, %v26
    %v28 = vmul.f32 %v27, 1.442695
    %v29 = vpow.pop %v28
    %v30 = vmax.f32 %v24, 0.0
    %v31 = vmul.f32 %v24, %v25
    %v32 = vsub.f32 %v30, %v31
    %v33 = vadd.f32 %v29, 1.0
    %v34 = vlog2.pop %v33
    %v35 = vmul.f32 %v34, 0.6931472
    %v36 = vmul.f32 -0.5, %v29
    %v37 = vadd.f32 %v36, 1.0
    %v38 = vmul.f32 %v37, %v29
    %v39 = vand.u32 2147483647, %v29
    %vm40 = vcmp.lt.f32.partialorder %v39, 0.0004427343
    %v41 = vsel %vm40, %v38, %v35
    %v42 = vadd.f32 %v32, %v41
    %v43 = vadd.f32 %v29, 1.0
    %v44 = vrcp.pop %v43
    %v45 = vmul.f32 %v43, %v44
    %v46 = vsub.f32 1.0, %v45
    %v47 = vmul.f32 %v44, %v46
    %v48 = vadd.f32 %v44, %v47
    %vm49 = vweird.f32 %v43
    %vm50 = vweird.f32 %v44
    %vm51 = vmor %vm49, %vm50
    %v52 = vsel %vm51, %v44, %v48
    %v53 = vand.u32 2147483647, %v43
    %vm54 = vcmp.eq.f32.partialorder %v53, 8.507059e+37
    %v55 = vand.u32 %v43, 2147483648
    %v56 = vor.u32 1.1754944e-38, %v55
    %v57 = vsel %vm54, %v56, %v52
    %v58 = vmul.f32 1.0, %v57
    %vm59 = vcmp.ge.f32.partialorder %v24, 0.0
    %v60 = vmul.f32 %v29, %v58
    %v61 = vsel %vm59, %v58, %v60
    %v62 = vmul.f32 %v61, %v25
    %v63 = vsub.f32 1.0, %v61
    %v64 = vsub.f32 1.0, %v25
    %v65 = vmul.f32 %v63, %v64
    %v66 = vadd.f32 %v62, %v65
    %v67 = vsub.f32 1.0, %v66
    %v68 = vmax.f32 %v67, 0.0
    %v69 = vmul.f32 %v68, %v68
    %v70 = vmul.f32 %v42, %v69
    %v71 = vlaneseq
    %v72 = vand.u32 %v71, 127
    %vm73 = vcmp.lt.s32.totalorder %v72, 64
    %v74 = vsel %vm73, %v70, 0.0
    %vm75 = vcmask 1041408
    %v76 = vsel %vm75, %v74, 0.0
    %77 = vadd.xlane.f32.xlu0 %v76
    %v78 = vpop.xlane.xlu0 %77
    %v79 = vrot.slane %v78, 4
    %v80 = vadd.f32 %v78, %v79
    %v81 = vrot.slane %v80, 2
    %v82 = vadd.f32 %v80, %v81
    %v83 = vrot.slane %v82, 1
    %v84 = vadd.f32 %v82, %v83
    %s85 = vtos %v84
    %v86 = vrcp.pop 64.0
    %v87 = vmul.f32 64.0, %v86
    %v88 = vsub.f32 1.0, %v87
    %v89 = vmul.f32 %v86, %v88
    %v90 = vadd.f32 %v86, %v89
    %vm91 = vweird.f32 %v86
    %v92 = vsel %vm91, %v86, %v90
    %s93 = vtos %v92
    %s94 = smul.f32 %s85, %s93
    %v95 = vrcp.pop 2.0
    %v96 = vmul.f32 2.0, %v95
    %v97 = vsub.f32 1.0, %v96
    %v98 = vmul.f32 %v95, %v97
    %v99 = vadd.f32 %v95, %v98
    %vm100 = vweird.f32 %v95
    %v101 = vsel %vm100, %v95, %v99
    %s102 = vtos %v101
    %s103 = smul.f32 %s94, %s102
    %v104 = vld [vmem:[#allocation2 + $0x1] sm:$0x1]
    %v105 = vld [vmem:[#allocation2 + $0x2] sm:$0x1]
    %v106 = vld [vmem:[#allocation2 + $0x3] sm:$0x1]
    %v107 = vsub.f32 %v104, %v105
    %v108 = vand.u32 2147483647, %v107
    %vm109 = vcmp.lt.f32.partialorder %v108, 1.0
    %v110 = vmul.f32 %v107, 0.5
    %v111 = vmul.f32 %v110, %v107
    %v112 = vsub.f32 %v108, 0.5
    %v113 = vsel %vm109, %v111, %v112
    %v114 = vmul.f32 %v113, %v106
    %vm115 = vcmask 1040384
    %v116 = vsel %vm115, %v114, 0.0
    %117 = vadd.xlane.f32.xlu0 %v116
    %v118 = vpop.xlane.xlu0 %117
    %v119 = vrot.slane %v118, 4
    %v120 = vadd.f32 %v118, %v119
    %v121 = vrot.slane %v120, 2
    %v122 = vadd.f32 %v120, %v121
    %v123 = vrot.slane %v122, 1
    %v124 = vadd.f32 %v122, %v123
    %s125 = vtos %v124
    %v126 = vrcp.pop 32.0
    %v127 = vmul.f32 32.0, %v126
    %v128 = vsub.f32 1.0, %v127
    %v129 = vmul.f32 %v126, %v128
    %v130 = vadd.f32 %v126, %v129
    %vm131 = vweird.f32 %v126
    %v132 = vsel %vm131, %v126, %v130
    %s133 = vtos %v132
    %s134 = smul.f32 %s125, %s133
    %s135 = smul.f32 %s134, 0.1
    %s136 = sadd.f32 %s103, %s135
    %v137 = vld [vmem:[#allocation2 + $0x4] sm:$0x1]
    %v138 = vld [vmem:[#allocation2 + $0x5] sm:$0x1]
    %v139 = vsub.f32 %v138, %v137
    %v140 = vmul.f32 %v139, %v139
    %v141 = vsel %vm115, %v140, 0.0
    %142 = vadd.xlane.f32.xlu0 %v141
    %v143 = vpop.xlane.xlu0 %142
    %v144 = vrot.slane %v143, 4
    %v145 = vadd.f32 %v143, %v144
    %v146 = vrot.slane %v145, 2
    %v147 = vadd.f32 %v145, %v146
    %v148 = vrot.slane %v147, 1
    %v149 = vadd.f32 %v147, %v148
    %s150 = vtos %v149
    %v151 = vrcp.pop 16.0
    %v152 = vmul.f32 16.0, %v151
    %v153 = vsub.f32 1.0, %v152
    %v154 = vmul.f32 %v151, %v153
    %v155 = vadd.f32 %v151, %v154
    %vm156 = vweird.f32 %v151
    %v157 = vsel %vm156, %v151, %v155
    %s158 = vtos %v157
    %s159 = smul.f32 %s150, %s158
    %s160 = smul.f32 %s159, 0.5
    %s161 = sadd.f32 %s136, %s160
    %s162 = scalar_lea.smem [#allocation5], 0
    %163 = sst [smem:[%s162]] %s161
    // Predicated region
    $region10: #{tpu_custom_call.1} parent=1 // pred_check
      _
    $region11: #{tpu_custom_call.1} parent=1 // pred_check_branch
      %165 = sbr.rel (0) target = $region13
    $region12: #{tpu_custom_call.1} parent=1 // pred_region
      %167 = vsyncadd [#allocation4], 0
      %s169 = sshll.u32 %s1, 4
      %s170 = int_to_ptr.hbm [resolvable:$true] %s169
      %172 = dma.smem_to_hbm [#allocation5], 16, %s170, [#allocation4]
    $region13: #{tpu_custom_call.1} parent=1 // pred_fallthru
      _
    // Predicated region
    $region14: #{tpu_custom_call.1} parent=1 // pred_check
      _
    $region15: #{tpu_custom_call.1} parent=1 // pred_check_branch
      %174 = sbr.rel (0) target = $region17
    $region16: #{tpu_custom_call.1} parent=1 // pred_region
      %176 = dma.done [#allocation4], 16
    $region17: #{tpu_custom_call.1} parent=1 // pred_fallthru
      _
    %177 = sfence
    %178 = vsyncpa [#allocation3], 1
    %179 = vsyncpa [#allocation4], 1

</llo_original>
